<compile_context>
chip_gen: v6e
topology: v6e:2x2x1
jax: 0.10.0
libtpu: 0.0.40
codegen_flags: <defaults>
</compile_context>

<pallas_src>
import functools

import jax
import jax.numpy as jnp
from jax import lax
from jax.experimental import pallas as pl
from jax.experimental.pallas import tpu as pltpu

ALPHA, BETA, GAMMA = 0.7, 0.4, 0.2        # fusion weights from the module __init__
LABEL_SMOOTHING = 0.1                     # nn.CrossEntropyLoss(label_smoothing=0.1)
# focal gamma = 2 (adeelh/pytorch-multi-class-focal-loss, reduction='mean')

_CE_TILE_CAP = 32768                      # max lanes per CE/Focal tile
_CE_TILE_BYTES = 1 << 20                  # ~1 MiB of logits per pipeline buffer
_LOVASZ_CHUNK = 512                       # blocked-cumsum chunk (resident bf16 tri matmul on MXU)


# ----------------------------------------------------------------------------
# CE (weighted, label-smoothed) + multi-class Focal: streaming partial sums
# ----------------------------------------------------------------------------
def _ce_focal_kernel(logits_ref, labels_ref, w_ref, out_ref, acc_ref, *, total_p):
    """Blocks: logits (1, C, TP) f32, labels (1, 1, TP) i32, w (C, 1) f32.
       acc (4, TP) f32 scratch rows = [w_target, w_target*nll, sum_c w_c*(-log p_c), focal].
       out (4, 1) f32 written at the last grid step."""
    b = pl.program_id(0)
    t = pl.program_id(1)
    nb = pl.num_programs(0)
    nt = pl.num_programs(1)

    @pl.when(jnp.logical_and(b == 0, t == 0))
    def _():
        acc_ref[...] = jnp.zeros_like(acc_ref)

    logits = logits_ref[0]                                       # (C, TP)
    labels = labels_ref[0]                                       # (1, TP)
    w = w_ref[...]                                               # (C, 1)
    c, tp = logits.shape

    # valid-pixel mask for a possibly padded tail tile
    lane = lax.broadcasted_iota(jnp.int32, (1, tp), 1)
    valid = (t * tp + lane) < total_p                            # (1, TP) bool

    cls = lax.broadcasted_iota(jnp.int32, (c, 1), 0)
    onehot = (labels == cls).astype(jnp.float32)                 # (C, TP) built in-kernel

    m = jnp.max(logits, axis=0, keepdims=True)                   # (1, TP)
    z = logits - m
    lse = jnp.log(jnp.sum(jnp.exp(z), axis=0, keepdims=True))    # (1, TP)

    # -log p_y and the smoothing term without materializing the (C, TP) -log_softmax slab
    z_y = jnp.sum(onehot * z, axis=0, keepdims=True)             # (1, TP) z[target]
    nll = lse - z_y                                              # (1, TP) -log p_target
    w_t = jnp.sum(onehot * w, axis=0, keepdims=True)             # (1, TP) weight[target]
    w_sum = jnp.sum(w, axis=0, keepdims=True)                    # (1, 1)
    smooth = w_sum * lse - jnp.sum(w * z, axis=0, keepdims=True) # (1, TP) sum_c w_c*(-log p_c)

    p_t = jnp.exp(-nll)
    ft = 1.0 - p_t
    focal = ft * ft * w_t * nll                                  # (1-p_t)^2 * w[y] * (-log p_y)

    zero = jnp.zeros_like(nll)
    partial = jnp.concatenate(
        [jnp.where(valid, w_t, zero),
         jnp.where(valid, w_t * nll, zero),
         jnp.where(valid, smooth, zero),
         jnp.where(valid, focal, zero)], axis=0)                 # (4, TP)
    acc_ref[...] += partial

    @pl.when(jnp.logical_and(b == nb - 1, t == nt - 1))
    def _():
        out_ref[...] = jnp.sum(acc_ref[...], axis=1, keepdims=True)


def _ce_tile_lanes(p, c):
    """Largest pixel tile: ~1 MiB of f32 logits per buffer, 128-lane aligned, capped."""
    t = (_CE_TILE_BYTES // (4 * c)) // 128 * 128
    t = max(512, min(t, _CE_TILE_CAP))
    return p if p <= t else t


def _ce_focal_sums(logits_bcp, labels_b1p, w_c1):
    bsz, c, p = logits_bcp.shape
    tile_p = _ce_tile_lanes(p, c)
    n_tiles = pl.cdiv(p, tile_p)
    kernel = functools.partial(_ce_focal_kernel, total_p=p)
    # TODO(synk): on v7x the pixel grid could be split across the 2 TensorCores
    # (leading parallel axis + per-core accumulator rows, summed in JAX).
    return pl.pallas_call(
        kernel,
        out_shape=jax.ShapeDtypeStruct((4, 1), jnp.float32),
        grid=(bsz, n_tiles),
        in_specs=[
            pl.BlockSpec((1, c, tile_p), lambda b, t: (b, 0, t)),
            pl.BlockSpec((1, 1, tile_p), lambda b, t: (b, 0, t)),
            pl.BlockSpec((c, 1), lambda b, t: (0, 0)),
        ],
        out_specs=pl.BlockSpec((4, 1), lambda b, t: (0, 0)),
        scratch_shapes=[pltpu.VMEM((4, tile_p), jnp.float32)],
        compiler_params=pltpu.CompilerParams(
            dimension_semantics=("arbitrary", "arbitrary"),
            vmem_limit_bytes=32 * 1024 * 1024),
    )(logits_bcp, labels_b1p, w_c1)


# ----------------------------------------------------------------------------
# Lovasz-Softmax rows: blocked cumsum over sorted pixels with per-row carries
# ----------------------------------------------------------------------------
def _lovasz_kernel(negerr_ref, fg_ref, gts_ref, tri_ref, loss_ref,
                   cumfg_ref, jprev_ref, acc_ref, *, total_p):
    """negerr/fg blocks: (R, K); gts (R, 1); tri (K, K) bf16 resident constant.
       Carries (R,1): running fg cumsum, previous-chunk jaccard, loss accumulator."""
    j = pl.program_id(0)
    n_chunks = pl.num_programs(0)
    r, k = negerr_ref.shape

    @pl.when(j == 0)
    def _():
        cumfg_ref[...] = jnp.zeros_like(cumfg_ref)
        jprev_ref[...] = jnp.zeros_like(jprev_ref)
        acc_ref[...] = jnp.zeros_like(acc_ref)

    lane = lax.broadcasted_iota(jnp.int32, (r, k), 1)
    valid = (j * k + lane) < total_p                              # (R, K) mask for padded tail

    err = jnp.where(valid, -negerr_ref[...], 0.0)                 # sorted (descending) errors
    fg = fg_ref[...]                                              # (R, K) bf16 in {0, 1}
    fg = jnp.where(valid, fg, jnp.zeros_like(fg))

    gts = gts_ref[...]                                            # (R, 1) total fg per row
    cumfg_prev = cumfg_ref[...]                                   # (R, 1)
    jacc_prev = jprev_ref[...]                                    # (R, 1)

    # within-chunk inclusive cumsum via resident bf16 upper-triangular matmul (f32 accumulate)
    cs_local = jnp.dot(fg, tri_ref[...], preferred_element_type=jnp.float32)   # (R, K)
    cumfg = cumfg_prev + cs_local                                 # global inclusive cumsum(fg)
    pos = (j * k + lane + 1).astype(jnp.float32)                  # global 1-based rank

    intersection = gts - cumfg
    union = gts + pos - cumfg                                     # >= 1 on valid lanes
    jacc = 1.0 - intersection / union

    # lovasz_grad: jaccard[i] - jaccard[i-1], carrying the boundary across chunks
    prev_in_chunk = pltpu.roll(jacc, shift=1, axis=1)             # lane i <- jacc[i-1] (circular)
    prev = jnp.where(lane == 0, jacc_prev, prev_in_chunk)
    grad = jacc - prev

    acc_ref[...] += jnp.sum(err * grad, axis=1, keepdims=True)    # dot(errors_sorted, grad)
    cumfg_ref[...] = cumfg[:, k - 1:]
    jprev_ref[...] = jacc[:, k - 1:]

    @pl.when(j == n_chunks - 1)
    def _():
        loss_ref[...] = acc_ref[...]


def _lovasz_losses(neg_err_sorted, fg_sorted_bf16, gts_r1, tri, total_p):
    r, p = neg_err_sorted.shape
    k = tri.shape[0]
    n_chunks = pl.cdiv(p, k)
    kernel = functools.partial(_lovasz_kernel, total_p=total_p)
    return pl.pallas_call(
        kernel,
        out_shape=jax.ShapeDtypeStruct((r, 1), jnp.float32),
        grid=(n_chunks,),
        in_specs=[
            pl.BlockSpec((r, k), lambda j: (0, j)),
            pl.BlockSpec((r, k), lambda j: (0, j)),
            pl.BlockSpec((r, 1), lambda j: (0, 0)),
            pl.BlockSpec((k, k), lambda j: (0, 0)),
        ],
        out_specs=pl.BlockSpec((r, 1), lambda j: (0, 0)),
        scratch_shapes=[pltpu.VMEM((r, 1), jnp.float32),
                        pltpu.VMEM((r, 1), jnp.float32),
                        pltpu.VMEM((r, 1), jnp.float32)],
        compiler_params=pltpu.CompilerParams(
            dimension_semantics=("arbitrary",),
            vmem_limit_bytes=32 * 1024 * 1024),
    )(neg_err_sorted, fg_sorted_bf16, gts_r1, tri)


# ----------------------------------------------------------------------------
# Fusion loss wrapper
# ----------------------------------------------------------------------------
def fusion_loss_invert(y_pred, y_true, class_weights,
                       alpha=ALPHA, beta=BETA, gamma=GAMMA):
    """y_pred: [B, C, H, W] f32 logits (NCHW); y_true: [B, H, W] int labels in [0, C)."""
    B, C, H, W = y_pred.shape
    P = H * W
    N = B * P

    # ---------- weighted CE (label_smoothing=0.1) + Focal (gamma=2, plain mean) ----------
    logits_bcp = y_pred.reshape(B, C, P).astype(jnp.float32)      # free reshape; no NCHW transpose
    labels_bp = y_true.reshape(B, P).astype(jnp.int32)
    w_c1 = class_weights.astype(jnp.float32).reshape(C, 1)

    sums = _ce_focal_sums(logits_bcp, labels_bp.reshape(B, 1, P), w_c1)
    sum_w, nll_sum, smooth_sum, focal_sum = sums[0, 0], sums[1, 0], sums[2, 0], sums[3, 0]
    ce = (1.0 - LABEL_SMOOTHING) * (nll_sum / sum_w) \
        + (LABEL_SMOOTHING / C) * (smooth_sum / sum_w)
    focal = focal_sum / N

    # ---------- Lovasz-Softmax (per_image=True, classes='present') ----------
    # The reference module feeds raw y_pred (logits) to LovaszLoss, so no softmax here.
    fg_bool = labels_bp[:, None, :] == jnp.arange(C, dtype=labels_bp.dtype)[None, :, None]
    errors = jnp.abs(fg_bool.astype(jnp.float32) - logits_bcp)    # (B, C, P)
    gts = jnp.sum(fg_bool, axis=-1).astype(jnp.float32)           # (B, C) class pixel counts

    # TODO(synk): descending sort has no clean Pallas TPU primitive; a single key/value
    # lax.sort (key = -errors, fg carried as bf16) stays in XLA glue (no argsort + gathers).
    neg_err_sorted, fg_sorted = lax.sort(
        (-errors.reshape(B * C, P), fg_bool.astype(jnp.bfloat16).reshape(B * C, P)),
        dimension=-1, num_keys=1)

    chunk = P if P <= _LOVASZ_CHUNK else _LOVASZ_CHUNK
    tri = (jnp.arange(chunk)[:, None] <= jnp.arange(chunk)[None, :]).astype(jnp.bfloat16)

    loss_bc = _lovasz_losses(neg_err_sorted, fg_sorted, gts.reshape(B * C, 1), tri, P)
    loss_bc = loss_bc.reshape(B, C)

    present = (gts > 0.5).astype(jnp.float32)                     # classes='present'
    per_image = jnp.sum(loss_bc * present, axis=1) / jnp.maximum(jnp.sum(present, axis=1), 1.0)
    lovasz = jnp.mean(per_image)                                  # mean over images (per_image=True)

    return alpha * ce + beta * lovasz + gamma * focal


if __name__ == "__main__":
    key = jax.random.PRNGKey(0)
    B, C, H, W = 2, 3, 16, 16
    k1, k2 = jax.random.split(key)
    y_pred = jax.random.normal(k1, (B, C, H, W), dtype=jnp.float32)
    y_true = jax.random.randint(k2, (B, H, W), 0, C, dtype=jnp.int32)

    # Deterministic stand-in for file-derived inverse_freq_weights (total / (3 * count_c)).
    counts = jnp.stack([jnp.sum(y_true == c) for c in range(C)]).astype(jnp.float32)
    class_weights = jnp.sum(counts) / (C * counts)

    loss = jax.jit(fusion_loss_invert)(y_pred, y_true, class_weights)
    jax.block_until_ready(loss)
    print("KERNEL_OK")
</pallas_src>

<mosaic_0001>
module attributes {stable_mosaic.version = 11 : i64} {
  func.func @_lovasz_kernel(%arg0: i32, %arg1: memref<6x256xf32, #tpu.memory_space<vmem>>, %arg2: memref<6x256xbf16, #tpu.memory_space<vmem>>, %arg3: memref<6x1xf32, #tpu.memory_space<vmem>>, %arg4: memref<256x256xbf16, #tpu.memory_space<vmem>>, %arg5: memref<6x1xf32, #tpu.memory_space<vmem>>, %arg6: memref<6x1xf32, #tpu.memory_space<vmem>>, %arg7: memref<6x1xf32, #tpu.memory_space<vmem>>, %arg8: memref<6x1xf32, #tpu.memory_space<vmem>>) attributes {dimension_semantics = [#tpu.dimension_semantics<arbitrary>], iteration_bounds = array<i64: 1>, scalar_prefetch = 0 : i64, scratch_operands = 3 : i64, tpu.core_type = #tpu.core_type<tc>, window_params = [{transform_indices = @transform_0, window_bounds = array<i64: 6, 256>}, {transform_indices = @transform_1, window_bounds = array<i64: 6, 256>}, {pipeline_mode = #tpu.pipeline_mode<synchronous>, transform_indices = @transform_2, window_bounds = array<i64: 6, 1>}, {pipeline_mode = #tpu.pipeline_mode<synchronous>, transform_indices = @transform_3, window_bounds = array<i64: 256, 256>}, {pipeline_mode = #tpu.pipeline_mode<synchronous>, transform_indices = @transform_4, window_bounds = array<i64: 6, 1>}]} {
    %c0_i32 = arith.constant 0 : i32
    %0 = arith.cmpi eq, %arg0, %c0_i32 : i32
    %1 = arith.extui %0 : i1 to i32
    %c0_i32_0 = arith.constant 0 : i32
    %2 = arith.cmpi ne, %1, %c0_i32_0 : i32
    scf.if %2 {
      %cst_31 = arith.constant 0.000000e+00 : f32
      %58 = vector.broadcast %cst_31 : f32 to vector<6x1xf32>
      %c0_32 = arith.constant 0 : index
      %c0_33 = arith.constant 0 : index
      %59 = vector.load %arg6[%c0_32, %c0_33] : memref<6x1xf32, #tpu.memory_space<vmem>>, vector<6x1xf32>
      tpu.vector_store %arg6[%c0_32, %c0_33], %58 {strides = array<i32>} : memref<6x1xf32, #tpu.memory_space<vmem>>, vector<6x1xf32>,
      %cst_34 = arith.constant 0.000000e+00 : f32
      %60 = vector.broadcast %cst_34 : f32 to vector<6x1xf32>
      %c0_35 = arith.constant 0 : index
      %c0_36 = arith.constant 0 : index
      %61 = vector.load %arg7[%c0_35, %c0_36] : memref<6x1xf32, #tpu.memory_space<vmem>>, vector<6x1xf32>
      tpu.vector_store %arg7[%c0_35, %c0_36], %60 {strides = array<i32>} : memref<6x1xf32, #tpu.memory_space<vmem>>, vector<6x1xf32>,
      %cst_37 = arith.constant 0.000000e+00 : f32
      %62 = vector.broadcast %cst_37 : f32 to vector<6x1xf32>
      %c0_38 = arith.constant 0 : index
      %c0_39 = arith.constant 0 : index
      %63 = vector.load %arg8[%c0_38, %c0_39] : memref<6x1xf32, #tpu.memory_space<vmem>>, vector<6x1xf32>
      tpu.vector_store %arg8[%c0_38, %c0_39], %62 {strides = array<i32>} : memref<6x1xf32, #tpu.memory_space<vmem>>, vector<6x1xf32>,
    } else {
    }
    %3 = tpu.iota {dimensions = array<i32: 1>} : vector<6x256xi32>
    %c256_i32 = arith.constant 256 : i32
    %4 = arith.muli %arg0, %c256_i32 : i32
    %5 = vector.broadcast %4 : i32 to vector<6x256xi32>
    %6 = arith.addi %5, %3 : vector<6x256xi32>
    %c256_i32_1 = arith.constant 256 : i32
    %7 = vector.broadcast %c256_i32_1 : i32 to vector<6x256xi32>
    %8 = arith.cmpi slt, %6, %7 : vector<6x256xi32>
    %c0 = arith.constant 0 : index
    %c0_2 = arith.constant 0 : index
    %9 = vector.load %arg1[%c0, %c0_2] : memref<6x256xf32, #tpu.memory_space<vmem>>, vector<6x256xf32>
    %cst = arith.constant 0.000000e+00 : f32
    %10 = vector.broadcast %cst : f32 to vector<6x256xf32>
    %11 = arith.subf %10, %9 : vector<6x256xf32>
    %cst_3 = arith.constant 0.000000e+00 : f32
    %12 = vector.broadcast %cst_3 : f32 to vector<6x256xf32>
    %13 = arith.select %8, %11, %12 : vector<6x256xi1>, vector<6x256xf32>
    %c0_4 = arith.constant 0 : index
    %c0_5 = arith.constant 0 : index
    %14 = vector.load %arg2[%c0_4, %c0_5] : memref<6x256xbf16, #tpu.memory_space<vmem>>, vector<6x256xbf16>
    %cst_6 = arith.constant 0.000000e+00 : bf16
    %15 = vector.broadcast %cst_6 : bf16 to vector<6x256xbf16>
    %16 = arith.select %8, %14, %15 : vector<6x256xi1>, vector<6x256xbf16>
    %c0_7 = arith.constant 0 : index
    %c0_8 = arith.constant 0 : index
    %17 = vector.load %arg3[%c0_7, %c0_8] : memref<6x1xf32, #tpu.memory_space<vmem>>, vector<6x1xf32>
    %c0_9 = arith.constant 0 : index
    %c0_10 = arith.constant 0 : index
    %18 = vector.load %arg6[%c0_9, %c0_10] : memref<6x1xf32, #tpu.memory_space<vmem>>, vector<6x1xf32>
    %c0_11 = arith.constant 0 : index
    %c0_12 = arith.constant 0 : index
    %19 = vector.load %arg7[%c0_11, %c0_12] : memref<6x1xf32, #tpu.memory_space<vmem>>, vector<6x1xf32>
    %c0_13 = arith.constant 0 : index
    %c0_14 = arith.constant 0 : index
    %20 = vector.load %arg4[%c0_13, %c0_14] : memref<256x256xbf16, #tpu.memory_space<vmem>>, vector<256x256xbf16>
    %cst_15 = arith.constant dense<0.000000e+00> : vector<6x256xf32>
    %21 = tpu.matmul %16, %20, %cst_15 {dimension_numbers = #tpu.dot_dimension_numbers<[1], [0], [0], [1], [0, 0, 1, 1], [], []>} : vector<6x256xbf16>, vector<256x256xbf16>, vector<6x256xf32> -> vector<6x256xf32>
    %22 = vector.broadcast %18 : vector<6x1xf32> to vector<6x256xf32>
    %23 = arith.addf %22, %21 : vector<6x256xf32>
    %c256_i32_16 = arith.constant 256 : i32
    %24 = arith.muli %arg0, %c256_i32_16 : i32
    %25 = vector.broadcast %24 : i32 to vector<6x256xi32>
    %26 = arith.addi %25, %3 : vector<6x256xi32>
    %c1_i32 = arith.constant 1 : i32
    %27 = vector.broadcast %c1_i32 : i32 to vector<6x256xi32>
    %28 = arith.addi %26, %27 : vector<6x256xi32>
    %29 = arith.sitofp %28 : vector<6x256xi32> to vector<6x256xf32>
    %30 = vector.broadcast %17 : vector<6x1xf32> to vector<6x256xf32>
    %31 = arith.subf %30, %23 : vector<6x256xf32>
    %32 = vector.broadcast %17 : vector<6x1xf32> to vector<6x256xf32>
    %33 = arith.addf %32, %29 : vector<6x256xf32>
    %34 = arith.subf %33, %23 : vector<6x256xf32>
    %35 = arith.divf %31, %34 : vector<6x256xf32>
    %cst_17 = arith.constant 1.000000e+00 : f32
    %36 = vector.broadcast %cst_17 : f32 to vector<6x256xf32>
    %37 = arith.subf %36, %35 : vector<6x256xf32>
    %c1_i32_18 = arith.constant 1 : i32
    %38 = tpu.dynamic_rotate %37 by %c1_i32_18 dim 1 : vector<6x256xf32>, i32 -> vector<6x256xf32>
    %c0_i32_19 = arith.constant 0 : i32
    %39 = vector.broadcast %c0_i32_19 : i32 to vector<6x256xi32>
    %40 = arith.cmpi eq, %3, %39 : vector<6x256xi32>
    %41 = vector.shape_cast %19 : vector<6x1xf32> to vector<6x1xf32>
    %42 = vector.broadcast %41 : vector<6x1xf32> to vector<6x256xf32>
    %43 = arith.select %40, %42, %38 : vector<6x256xi1>, vector<6x256xf32>
    %44 = arith.subf %37, %43 : vector<6x256xf32>
    %c0_20 = arith.constant 0 : index
    %c0_21 = arith.constant 0 : index
    %45 = vector.load %arg8[%c0_20, %c0_21] : memref<6x1xf32, #tpu.memory_space<vmem>>, vector<6x1xf32>
    %46 = arith.mulf %13, %44 : vector<6x256xf32>
    %cst_22 = arith.constant dense<0.000000e+00> : vector<6xf32>
    %47 = vector.multi_reduction <add>, %46, %cst_22 [1] : vector<6x256xf32> to vector<6xf32>
    %48 = vector.shape_cast %47 : vector<6xf32> to vector<6x1xf32>
    %49 = arith.addf %45, %48 : vector<6x1xf32>
    %c0_23 = arith.constant 0 : index
    %c0_24 = arith.constant 0 : index
    %50 = vector.load %arg8[%c0_23, %c0_24] : memref<6x1xf32, #tpu.memory_space<vmem>>, vector<6x1xf32>
    tpu.vector_store %arg8[%c0_23, %c0_24], %49 {strides = array<i32>} : memref<6x1xf32, #tpu.memory_space<vmem>>, vector<6x1xf32>,
    %51 = vector.extract_strided_slice %23 {offsets = [0, 255], sizes = [6, 1], strides = [1, 1]} : vector<6x256xf32> to vector<6x1xf32>
    %c0_25 = arith.constant 0 : index
    %c0_26 = arith.constant 0 : index
    %52 = vector.load %arg6[%c0_25, %c0_26] : memref<6x1xf32, #tpu.memory_space<vmem>>, vector<6x1xf32>
    tpu.vector_store %arg6[%c0_25, %c0_26], %51 {strides = array<i32>} : memref<6x1xf32, #tpu.memory_space<vmem>>, vector<6x1xf32>,
    %53 = vector.extract_strided_slice %37 {offsets = [0, 255], sizes = [6, 1], strides = [1, 1]} : vector<6x256xf32> to vector<6x1xf32>
    %c0_27 = arith.constant 0 : index
    %c0_28 = arith.constant 0 : index
    %54 = vector.load %arg7[%c0_27, %c0_28] : memref<6x1xf32, #tpu.memory_space<vmem>>, vector<6x1xf32>
    tpu.vector_store %arg7[%c0_27, %c0_28], %53 {strides = array<i32>} : memref<6x1xf32, #tpu.memory_space<vmem>>, vector<6x1xf32>,
    %c0_i32_29 = arith.constant 0 : i32
    %55 = arith.cmpi eq, %arg0, %c0_i32_29 : i32
    %56 = arith.extui %55 : i1 to i32
    %c0_i32_30 = arith.constant 0 : i32
    %57 = arith.cmpi ne, %56, %c0_i32_30 : i32
    scf.if %57 {
      %c0_31 = arith.constant 0 : index
      %c0_32 = arith.constant 0 : index
      %58 = vector.load %arg8[%c0_31, %c0_32] : memref<6x1xf32, #tpu.memory_space<vmem>>, vector<6x1xf32>
      %c0_33 = arith.constant 0 : index
      %c0_34 = arith.constant 0 : index
      %59 = vector.load %arg5[%c0_33, %c0_34] : memref<6x1xf32, #tpu.memory_space<vmem>>, vector<6x1xf32>
      tpu.vector_store %arg5[%c0_33, %c0_34], %58 {strides = array<i32>} : memref<6x1xf32, #tpu.memory_space<vmem>>, vector<6x1xf32>,
    } else {
    }
    return
  }
  func.func @transform_0(%arg0: i32) -> (i32, i32) {
    %c0_i32 = arith.constant 0 : i32
    %c0_i32_0 = arith.constant 0 : i32
    return %c0_i32, %arg0 : i32, i32
  }
  func.func @transform_1(%arg0: i32) -> (i32, i32) {
    %c0_i32 = arith.constant 0 : i32
    %c0_i32_0 = arith.constant 0 : i32
    return %c0_i32, %arg0 : i32, i32
  }
  func.func @transform_2(%arg0: i32) -> (i32, i32) {
    %c0_i32 = arith.constant 0 : i32
    %c0_i32_0 = arith.constant 0 : i32
    %c0_i32_1 = arith.constant 0 : i32
    return %c0_i32, %c0_i32_0 : i32, i32
  }
  func.func @transform_3(%arg0: i32) -> (i32, i32) {
    %c0_i32 = arith.constant 0 : i32
    %c0_i32_0 = arith.constant 0 : i32
    %c0_i32_1 = arith.constant 0 : i32
    return %c0_i32, %c0_i32_0 : i32, i32
  }
  func.func @transform_4(%arg0: i32) -> (i32, i32) {
    %c0_i32 = arith.constant 0 : i32
    %c0_i32_0 = arith.constant 0 : i32
    %c0_i32_1 = arith.constant 0 : i32
    return %c0_i32, %c0_i32_0 : i32, i32
  }
}

module attributes {stable_mosaic.version = 11 : i64} {
  func.func @_ce_focal_kernel(%arg0: i32, %arg1: i32, %arg2: memref<1x3x256xf32, #tpu.memory_space<vmem>>, %arg3: memref<1x1x256xi32, #tpu.memory_space<vmem>>, %arg4: memref<3x1xf32, #tpu.memory_space<vmem>>, %arg5: memref<4x1xf32, #tpu.memory_space<vmem>>, %arg6: memref<4x256xf32, #tpu.memory_space<vmem>>) attributes {dimension_semantics = [#tpu.dimension_semantics<arbitrary>, #tpu.dimension_semantics<arbitrary>], iteration_bounds = array<i64: 2, 1>, scalar_prefetch = 0 : i64, scratch_operands = 1 : i64, tpu.core_type = #tpu.core_type<tc>, window_params = [{transform_indices = @transform_0, window_bounds = array<i64: 1, 3, 256>}, {transform_indices = @transform_1, window_bounds = array<i64: 1, 1, 256>}, {pipeline_mode = #tpu.pipeline_mode<synchronous>, transform_indices = @transform_2, window_bounds = array<i64: 3, 1>}, {pipeline_mode = #tpu.pipeline_mode<synchronous>, transform_indices = @transform_3, window_bounds = array<i64: 4, 1>}]} {
    %c0_i32 = arith.constant 0 : i32
    %0 = arith.cmpi eq, %arg0, %c0_i32 : i32
    %c0_i32_0 = arith.constant 0 : i32
    %1 = arith.cmpi eq, %arg1, %c0_i32_0 : i32
    %2 = arith.andi %0, %1 : i1
    %3 = arith.extui %2 : i1 to i32
    %c0_i32_1 = arith.constant 0 : i32
    %4 = arith.cmpi ne, %3, %c0_i32_1 : i32
    scf.if %4 {
      %cst_24 = arith.constant 0.000000e+00 : f32
      %70 = vector.broadcast %cst_24 : f32 to vector<4x256xf32>
      %c0_25 = arith.constant 0 : index
      %c0_26 = arith.constant 0 : index
      %71 = vector.load %arg6[%c0_25, %c0_26] : memref<4x256xf32, #tpu.memory_space<vmem>>, vector<4x256xf32>
      tpu.vector_store %arg6[%c0_25, %c0_26], %70 {strides = array<i32>} : memref<4x256xf32, #tpu.memory_space<vmem>>, vector<4x256xf32>,
    } else {
    }
    %c0 = arith.constant 0 : index
    %c0_2 = arith.constant 0 : index
    %c0_3 = arith.constant 0 : index
    %5 = vector.load %arg2[%c0, %c0_2, %c0_3] : memref<1x3x256xf32, #tpu.memory_space<vmem>>, vector<1x3x256xf32>
    %6 = vector.shape_cast %5 : vector<1x3x256xf32> to vector<3x256xf32>
    %c0_4 = arith.constant 0 : index
    %c0_5 = arith.constant 0 : index
    %c0_6 = arith.constant 0 : index
    %7 = vector.load %arg3[%c0_4, %c0_5, %c0_6] : memref<1x1x256xi32, #tpu.memory_space<vmem>>, vector<1x1x256xi32>
    %8 = vector.shape_cast %7 : vector<1x1x256xi32> to vector<1x256xi32>
    %c0_7 = arith.constant 0 : index
    %c0_8 = arith.constant 0 : index
    %9 = vector.load %arg4[%c0_7, %c0_8] : memref<3x1xf32, #tpu.memory_space<vmem>>, vector<3x1xf32>
    %10 = tpu.iota {dimensions = array<i32: 1>} : vector<1x256xi32>
    %c256_i32 = arith.constant 256 : i32
    %11 = arith.muli %arg1, %c256_i32 : i32
    %12 = vector.broadcast %11 : i32 to vector<1x256xi32>
    %13 = arith.addi %12, %10 : vector<1x256xi32>
    %c256_i32_9 = arith.constant 256 : i32
    %14 = vector.broadcast %c256_i32_9 : i32 to vector<1x256xi32>
    %15 = arith.cmpi slt, %13, %14 : vector<1x256xi32>
    %16 = tpu.iota {dimensions = array<i32: 0>} : vector<3x1xi32>
    %17 = vector.broadcast %8 : vector<1x256xi32> to vector<3x256xi32>
    %18 = vector.broadcast %16 : vector<3x1xi32> to vector<3x256xi32>
    %19 = arith.cmpi eq, %17, %18 : vector<3x256xi32>
    %20 = arith.extui %19 : vector<3x256xi1> to vector<3x256xi32>
    %21 = arith.sitofp %20 : vector<3x256xi32> to vector<3x256xf32>
    %cst = arith.constant dense<0xFF800000> : vector<256xf32>
    %22 = vector.multi_reduction <maximumf>, %6, %cst [0] : vector<3x256xf32> to vector<256xf32>
    %23 = vector.shape_cast %22 : vector<256xf32> to vector<1x256xf32>
    %24 = vector.broadcast %23 : vector<1x256xf32> to vector<3x256xf32>
    %25 = arith.subf %6, %24 : vector<3x256xf32>
    %26 = math.exp %25 : vector<3x256xf32>
    %cst_10 = arith.constant dense<0.000000e+00> : vector<256xf32>
    %27 = vector.multi_reduction <add>, %26, %cst_10 [0] : vector<3x256xf32> to vector<256xf32>
    %28 = vector.shape_cast %27 : vector<256xf32> to vector<1x256xf32>
    %29 = math.log %28 : vector<1x256xf32>
    %30 = arith.mulf %21, %25 : vector<3x256xf32>
    %cst_11 = arith.constant dense<0.000000e+00> : vector<256xf32>
    %31 = vector.multi_reduction <add>, %30, %cst_11 [0] : vector<3x256xf32> to vector<256xf32>
    %32 = vector.shape_cast %31 : vector<256xf32> to vector<1x256xf32>
    %33 = arith.subf %29, %32 : vector<1x256xf32>
    %34 = vector.broadcast %9 : vector<3x1xf32> to vector<3x256xf32>
    %35 = arith.mulf %21, %34 : vector<3x256xf32>
    %cst_12 = arith.constant dense<0.000000e+00> : vector<256xf32>
    %36 = vector.multi_reduction <add>, %35, %cst_12 [0] : vector<3x256xf32> to vector<256xf32>
    %37 = vector.shape_cast %36 : vector<256xf32> to vector<1x256xf32>
    %cst_13 = arith.constant dense<0.000000e+00> : vector<1xf32>
    %38 = vector.multi_reduction <add>, %9, %cst_13 [0] : vector<3x1xf32> to vector<1xf32>
    %39 = vector.shape_cast %38 : vector<1xf32> to vector<1x1xf32>
    %40 = vector.broadcast %39 : vector<1x1xf32> to vector<1x256xf32>
    %41 = arith.mulf %40, %29 : vector<1x256xf32>
    %42 = vector.broadcast %9 : vector<3x1xf32> to vector<3x256xf32>
    %43 = arith.mulf %42, %25 : vector<3x256xf32>
    %cst_14 = arith.constant dense<0.000000e+00> : vector<256xf32>
    %44 = vector.multi_reduction <add>, %43, %cst_14 [0] : vector<3x256xf32> to vector<256xf32>
    %45 = vector.shape_cast %44 : vector<256xf32> to vector<1x256xf32>
    %46 = arith.subf %41, %45 : vector<1x256xf32>
    %cst_15 = arith.constant 0.000000e+00 : f32
    %47 = vector.broadcast %cst_15 : f32 to vector<1x256xf32>
    %48 = arith.subf %47, %33 : vector<1x256xf32>
    %49 = math.exp %48 : vector<1x256xf32>
    %cst_16 = arith.constant 1.000000e+00 : f32
    %50 = vector.broadcast %cst_16 : f32 to vector<1x256xf32>
    %51 = arith.subf %50, %49 : vector<1x256xf32>
    %52 = arith.mulf %51, %51 : vector<1x256xf32>
    %53 = arith.mulf %52, %37 : vector<1x256xf32>
    %54 = arith.mulf %53, %33 : vector<1x256xf32>
    %cst_17 = arith.constant 0.000000e+00 : f32
    %55 = vector.broadcast %cst_17 : f32 to vector<1x256xf32>
    %56 = arith.select %15, %37, %55 : vector<1x256xi1>, vector<1x256xf32>
    %57 = arith.mulf %37, %33 : vector<1x256xf32>
    %58 = arith.select %15, %57, %55 : vector<1x256xi1>, vector<1x256xf32>
    %59 = arith.select %15, %46, %55 : vector<1x256xi1>, vector<1x256xf32>
    %60 = arith.select %15, %54, %55 : vector<1x256xi1>, vector<1x256xf32>
    %61 = tpu.concatenate %56, %58, %59, %60 in 0 : vector<1x256xf32>, vector<1x256xf32>, vector<1x256xf32>, vector<1x256xf32> -> vector<4x256xf32>
    %c0_18 = arith.constant 0 : index
    %c0_19 = arith.constant 0 : index
    %62 = vector.load %arg6[%c0_18, %c0_19] : memref<4x256xf32, #tpu.memory_space<vmem>>, vector<4x256xf32>
    %63 = arith.addf %62, %61 : vector<4x256xf32>
    %c0_20 = arith.constant 0 : index
    %c0_21 = arith.constant 0 : index
    %64 = vector.load %arg6[%c0_20, %c0_21] : memref<4x256xf32, #tpu.memory_space<vmem>>, vector<4x256xf32>
    tpu.vector_store %arg6[%c0_20, %c0_21], %63 {strides = array<i32>} : memref<4x256xf32, #tpu.memory_space<vmem>>, vector<4x256xf32>,
    %c1_i32 = arith.constant 1 : i32
    %65 = arith.cmpi eq, %arg0, %c1_i32 : i32
    %c0_i32_22 = arith.constant 0 : i32
    %66 = arith.cmpi eq, %arg1, %c0_i32_22 : i32
    %67 = arith.andi %65, %66 : i1
    %68 = arith.extui %67 : i1 to i32
    %c0_i32_23 = arith.constant 0 : i32
    %69 = arith.cmpi ne, %68, %c0_i32_23 : i32
    scf.if %69 {
      %c0_24 = arith.constant 0 : index
      %c0_25 = arith.constant 0 : index
      %70 = vector.load %arg6[%c0_24, %c0_25] : memref<4x256xf32, #tpu.memory_space<vmem>>, vector<4x256xf32>
      %cst_26 = arith.constant dense<0.000000e+00> : vector<4xf32>
      %71 = vector.multi_reduction <add>, %70, %cst_26 [1] : vector<4x256xf32> to vector<4xf32>
      %72 = vector.shape_cast %71 : vector<4xf32> to vector<4x1xf32>
      %c0_27 = arith.constant 0 : index
      %c0_28 = arith.constant 0 : index
      %73 = vector.load %arg5[%c0_27, %c0_28] : memref<4x1xf32, #tpu.memory_space<vmem>>, vector<4x1xf32>
      tpu.vector_store %arg5[%c0_27, %c0_28], %72 {strides = array<i32>} : memref<4x1xf32, #tpu.memory_space<vmem>>, vector<4x1xf32>,
    } else {
    }
    return
  }
  func.func @transform_0(%arg0: i32, %arg1: i32) -> (i32, i32, i32) {
    %c0_i32 = arith.constant 0 : i32
    %c0_i32_0 = arith.constant 0 : i32
    return %arg0, %c0_i32, %arg1 : i32, i32, i32
  }
  func.func @transform_1(%arg0: i32, %arg1: i32) -> (i32, i32, i32) {
    %c0_i32 = arith.constant 0 : i32
    %c0_i32_0 = arith.constant 0 : i32
    return %arg0, %c0_i32, %arg1 : i32, i32, i32
  }
  func.func @transform_2(%arg0: i32, %arg1: i32) -> (i32, i32) {
    %c0_i32 = arith.constant 0 : i32
    %c0_i32_0 = arith.constant 0 : i32
    %c0_i32_1 = arith.constant 0 : i32
    return %c0_i32, %c0_i32_0 : i32, i32
  }
  func.func @transform_3(%arg0: i32, %arg1: i32) -> (i32, i32) {
    %c0_i32 = arith.constant 0 : i32
    %c0_i32_0 = arith.constant 0 : i32
    %c0_i32_1 = arith.constant 0 : i32
    return %c0_i32, %c0_i32_0 : i32, i32
  }
}

</mosaic_0001>

<llo_original>
// kernel: eq.13
$region0: #{eq.13}
  #allocation0 [shape = 's32[1]{0}', space=sflag, size = 0x4, scoped, tag = 'scoped memory for eq.13']
  %s0 = inlined_call_operand.vmem [shape: s32[2,256], index: 0, kind: input, shape index: {}]
  %s1 = inlined_call_operand.vmem [shape: s32[2,3,256], index: 1, kind: output, shape index: {}]
  // Predicated region
  $region2: #{eq.13} parent=0 // pred_check
    _
  $region3: #{eq.13} parent=0 // pred_check_branch
    %3 = sbr.rel (0) target = $region5
  $region4: #{eq.13} parent=0 // pred_region
    _
  $region5: #{eq.13} parent=0 // pred_fallthru
    _
  %v4 = vld [vmem:[%s0] ss:$0 sm:$0xff]
  %5 = vst [vmem:[%s1] sm:$0xf] %v4
  %s6 = scalar_lea.vmem %s0, 1
  %v7 = vld [vmem:[%s6] ss:$0 sm:$0xff]
  %s8 = scalar_lea.vmem %s1, 8
  %9 = vst [vmem:[%s8] sm:$0xf] %v7
  %s10 = scalar_lea.vmem %s0, 2
  %v11 = vld [vmem:[%s10] ss:$0 sm:$0xff]
  %s12 = scalar_lea.vmem %s1, 4
  %13 = vst [vmem:[%s12] sm:$0xf] %v11
  %s14 = scalar_lea.vmem %s0, 2
  %s15 = scalar_lea.vmem %s14, 1
  %v16 = vld [vmem:[%s15] ss:$0 sm:$0xff]
  %s17 = scalar_lea.vmem %s1, 12
  %18 = vst [vmem:[%s17] sm:$0xf] %v16

// kernel: eq.12
$region0: #{eq.12}
  %s0 = inlined_call_operand.hbm [shape: s32[2,16,16], index: 0, kind: input, shape index: {}]
  %s1 = inlined_call_operand.vmem [shape: s32[2,256], index: 1, kind: output, shape index: {}]
  $region1: #{eq.12} parent=0
    #allocation0 [shape = 'u8[16384]{0}', space=vmem, size = 0x4000, scoped, tag = 'operand span for operand 0']
    #allocation1 [shape = 's32[1]{0}', space=sflag, size = 0x4, scoped, tag = 'scoped memory for eq.12']
    #allocation2 [shape = 'u8[8192]{0}', space=vmem, size = 0x2000, scoped, tag = 'scoped mem for output reshape']
    %2 = vsyncpa [#allocation1], 0
    %s4 = ssub.s32 512, 512
    %5 = vsyncadd [#allocation1], %s4
    %s7 = sshll.u32 [#allocation0], 4
    %s8 = int_to_ptr.vmem [resolvable:$true] %s7
    %10 = dma.hbm_to_vmem [thread:$0]  %s0, 512, %s8, [#allocation1]
    %11 = dma.done [#allocation1], 512
    %v12 = vld [vmem:[#allocation0] ss:$8 sm:$0xf]
    %vm13 = vcmask 130048
    %14 = vst.msk [vmem:[#allocation2] ss:$8 sm:$0x3] %vm13, %v12
    %s15 = scalar_lea.vmem [#allocation2], 4294967281
    %16 = vst.msk [vmem:[%s15] ss:$8 sm:$0xc] %vm13, %v12
    %s17 = scalar_lea.vmem [#allocation0], 7
    %s18 = smov 3
    %v19 = vld [vmem:[%s17] ss:$16 sm:%s18]
    %s20 = scalar_lea.vmem [#allocation0], 4294967279
    %s21 = smov 12
    %v22 = vld [vmem:[%s20] ss:$16 sm:%s21]
    %vm23 = vcmask 1043458
    %v24 = vsel %vm23, %v22, %v19
    %25 = vrot.lane.b32.xlu0 %v24, 112
    %v26 = vpop.permute.xlu0 %25
    %vm27 = vcmask 1048448
    %28 = vst.msk [vmem:[#allocation2] sm:$0x3] %vm27, %v26
    %s29 = scalar_lea.vmem [#allocation2], 6
    %30 = vst.msk [vmem:[%s29] sm:$0xc] %vm27, %v26
    %s31 = scalar_lea.vmem [#allocation0], 6
    %s32 = smov 3
    %v33 = vld [vmem:[%s31] ss:$16 sm:%s32]
    %s34 = scalar_lea.vmem [#allocation0], 4294967278
    %s35 = smov 12
    %v36 = vld [vmem:[%s34] ss:$16 sm:%s35]
    %vm37 = vcmask 1043458
    %v38 = vsel %vm37, %v36, %v33
    %39 = vrot.lane.b32.xlu0 %v38, 96
    %v40 = vpop.permute.xlu0 %39
    %vm41 = vcmask 917248
    %42 = vst.msk [vmem:[#allocation2] sm:$0x3] %vm41, %v40
    %s43 = scalar_lea.vmem [#allocation2], 6
    %44 = vst.msk [vmem:[%s43] sm:$0xc] %vm41, %v40
    %s45 = scalar_lea.vmem [#allocation0], 5
    %s46 = smov 3
    %v47 = vld [vmem:[%s45] ss:$16 sm:%s46]
    %s48 = scalar_lea.vmem [#allocation0], 4294967277
    %s49 = smov 12
    %v50 = vld [vmem:[%s48] ss:$16 sm:%s49]
    %vm51 = vcmask 1043458
    %v52 = vsel %vm51, %v50, %v47
    %53 = vrot.lane.b32.xlu0 %v52, 80
    %v54 = vpop.permute.xlu0 %53
    %vm55 = vcmask 786048
    %56 = vst.msk [vmem:[#allocation2] sm:$0x3] %vm55, %v54
    %s57 = scalar_lea.vmem [#allocation2], 6
    %58 = vst.msk [vmem:[%s57] sm:$0xc] %vm55, %v54
    %s59 = scalar_lea.vmem [#allocation0], 4
    %s60 = smov 3
    %v61 = vld [vmem:[%s59] ss:$16 sm:%s60]
    %s62 = scalar_lea.vmem [#allocation0], 4294967276
    %s63 = smov 12
    %v64 = vld [vmem:[%s62] ss:$16 sm:%s63]
    %vm65 = vcmask 1043458
    %v66 = vsel %vm65, %v64, %v61
    %67 = vrot.lane.b32.xlu0 %v66, 64
    %v68 = vpop.permute.xlu0 %67
    %vm69 = vcmask 654848
    %70 = vst.msk [vmem:[#allocation2] sm:$0x3] %vm69, %v68
    %s71 = scalar_lea.vmem [#allocation2], 6
    %72 = vst.msk [vmem:[%s71] sm:$0xc] %vm69, %v68
    %s73 = scalar_lea.vmem [#allocation0], 3
    %s74 = smov 3
    %v75 = vld [vmem:[%s73] ss:$16 sm:%s74]
    %s76 = scalar_lea.vmem [#allocation0], 4294967275
    %s77 = smov 12
    %v78 = vld [vmem:[%s76] ss:$16 sm:%s77]
    %vm79 = vcmask 1043458
    %v80 = vsel %vm79, %v78, %v75
    %81 = vrot.lane.b32.xlu0 %v80, 48
    %v82 = vpop.permute.xlu0 %81
    %vm83 = vcmask 523648
    %84 = vst.msk [vmem:[#allocation2] sm:$0x3] %vm83, %v82
    %s85 = scalar_lea.vmem [#allocation2], 6
    %86 = vst.msk [vmem:[%s85] sm:$0xc] %vm83, %v82
    %s87 = scalar_lea.vmem [#allocation0], 2
    %s88 = smov 3
    %v89 = vld [vmem:[%s87] ss:$16 sm:%s88]
    %s90 = scalar_lea.vmem [#allocation0], 4294967274
    %s91 = smov 12
    %v92 = vld [vmem:[%s90] ss:$16 sm:%s91]
    %vm93 = vcmask 1043458
    %v94 = vsel %vm93, %v92, %v89
    %95 = vrot.lane.b32.xlu0 %v94, 32
    %v96 = vpop.permute.xlu0 %95
    %vm97 = vcmask 392448
    %98 = vst.msk [vmem:[#allocation2] sm:$0x3] %vm97, %v96
    %s99 = scalar_lea.vmem [#allocation2], 6
    %100 = vst.msk [vmem:[%s99] sm:$0xc] %vm97, %v96
    %s101 = scalar_lea.vmem [#allocation0], 1
    %s102 = smov 3
    %v103 = vld [vmem:[%s101] ss:$16 sm:%s102]
    %s104 = scalar_lea.vmem [#allocation0], 4294967273
    %s105 = smov 12
    %v106 = vld [vmem:[%s104] ss:$16 sm:%s105]
    %vm107 = vcmask 1043458
    %v108 = vsel %vm107, %v106, %v103
    %109 = vrot.lane.b32.xlu0 %v108, 16
    %v110 = vpop.permute.xlu0 %109
    %vm111 = vcmask 261248
    %112 = vst.msk [vmem:[#allocation2] sm:$0x3] %vm111, %v110
    %s113 = scalar_lea.vmem [#allocation2], 6
    %114 = vst.msk [vmem:[%s113] sm:$0xc] %vm111, %v110
    %s116 = sshll.u32 1, 2
    %s117 = ssub.s32 %s116, 1
    %v119 = vld [vmem:[#allocation2] sm:%s117]
    %s120 = sshll.u32 1, 2
    %s121 = ssub.s32 %s120, 1
    %122 = vst [vmem:[%s1] sm:%s121] %v119
    %s123 = scalar_lea.vmem [#allocation2], 8
    %v124 = vld [vmem:[%s123] sm:%s117]
    %s125 = sshll.u32 1, 2
    %s126 = ssub.s32 %s125, 1
    %s127 = scalar_lea.vmem %s1, 2
    %128 = vst [vmem:[%s127] sm:%s126] %v124
    %129 = vsyncpa [#allocation1], 1

</llo_original>
